<compile_context>
chip_gen: v6e
topology: v6e:2x2x1
jax: 0.10.0
libtpu: 0.0.40
codegen_flags: <defaults>
</compile_context>

<pallas_src>
import jax
import jax.numpy as jnp
from jax.experimental import pallas as pl
from jax.experimental.pallas import tpu as pltpu


def _kl_loss_kernel(x_ref, t_ref, o_ref):
    """Per-row KL(softmax(t) || softmax(x)) for one (tile_rows, N) block.

    Regrouped so no full-tile q / log_q temporaries are materialized:
      sum_j q_j * (log q_j - log p_j)
        = (1/T) * sum_j e^{ts_j} * (ts_j - xs_j) + lse_x - log T
    where xs/ts are the max-shifted logits, T = sum_j e^{ts_j},
    lse_x = log sum_j e^{xs_j}.
    """
    x = x_ref[...].astype(jnp.float32)
    t = t_ref[...].astype(jnp.float32)

    # Stable log-sum-exp of the inputs (log_softmax(inputs, dim=-1) pieces).
    xs = x - jnp.max(x, axis=-1, keepdims=True)
    lse_x = jnp.log(jnp.sum(jnp.exp(xs), axis=-1, keepdims=True))

    # Stable softmax pieces of the targets.
    ts = t - jnp.max(t, axis=-1, keepdims=True)
    t_exp = jnp.exp(ts)
    t_sum = jnp.sum(t_exp, axis=-1, keepdims=True)

    weighted = jnp.sum(t_exp * (ts - xs), axis=-1, keepdims=True)
    o_ref[...] = weighted / t_sum + lse_x - jnp.log(t_sum)


def _vmem_capacity_bytes():
    try:
        return int(pltpu.get_tpu_info().vmem_capacity_bytes)
    except Exception:
        return 64 * 1024 * 1024  # conservative fallback: v7x per-TensorCore VMEM


def _pick_tile_rows(rows, n, itemsize, vmem_limit_bytes):
    # Per-row VMEM cost: 2 inputs x 2 pipeline buffers in the native dtype,
    # plus ~4 tile-sized f32 temporaries live inside the kernel body.
    # TODO(synk): for vocab-scale N where even 8 rows x N exceeds VMEM, add an
    # N-axis grid with streaming (online) log-sum-exp accumulation.
    per_row = n * (4 * itemsize + 4 * 4)
    budget = int(vmem_limit_bytes * 0.6)          # ~40% headroom for the rest
    t = max(8, budget // per_row)
    t = min(t, 4096, rows)
    if t >= rows:
        return rows                               # single full-dim block
    t -= t % 8                                    # keep the (8, 128) sublane rule
    return max(t, 8)


def kl_loss(inputs, targets, *, tile_rows=None):
    """KLDivLoss(reduction='batchmean')(log_softmax(inputs,-1), softmax(targets,-1))."""
    assert inputs.shape == targets.shape and inputs.ndim >= 2
    batch_size = inputs.shape[0]
    n = inputs.shape[-1]
    x2 = inputs.reshape(-1, n)
    t2 = targets.reshape(-1, n)
    rows = x2.shape[0]

    vmem_cap = _vmem_capacity_bytes()
    # ~90 MiB on v5e/v6e (128 MiB physical), ~45 MiB on v7x (64 MiB physical).
    vmem_limit = int(vmem_cap * 0.7)

    if tile_rows is None:
        itemsize = max(jnp.dtype(x2.dtype).itemsize, jnp.dtype(t2.dtype).itemsize)
        tile_rows = _pick_tile_rows(rows, n, itemsize, vmem_limit)
    tile_rows = min(int(tile_rows), rows)

    rows_pad = pl.cdiv(rows, tile_rows) * tile_rows
    if rows_pad != rows:
        # Zero-pad the ragged last tile; padded rows produce finite values that
        # are sliced away before the final reduction.
        x2 = jnp.pad(x2, ((0, rows_pad - rows), (0, 0)))
        t2 = jnp.pad(t2, ((0, rows_pad - rows), (0, 0)))

    row_kl = pl.pallas_call(
        _kl_loss_kernel,
        out_shape=jax.ShapeDtypeStruct((rows_pad, 1), jnp.float32),
        grid_spec=pltpu.PrefetchScalarGridSpec(
            num_scalar_prefetch=0,
            grid=(rows_pad // tile_rows,),
            in_specs=[
                pl.BlockSpec((tile_rows, n), lambda i: (i, 0)),
                pl.BlockSpec((tile_rows, n), lambda i: (i, 0)),
            ],
            out_specs=pl.BlockSpec((tile_rows, 1), lambda i: (i, 0)),
        ),
        compiler_params=pltpu.CompilerParams(
            # Per-tile partial results -> no cross-tile dependency, so the grid
            # can shard across both v7x TensorCores (neutral on v5e/v6e).
            dimension_semantics=("parallel",),
            vmem_limit_bytes=vmem_limit,
        ),
    )(x2, t2)

    # 'batchmean' reduction: total KL sum divided by the leading batch dim.
    return jnp.sum(row_kl[:rows, 0]) / batch_size


def _kl_loss_ref(inputs, targets):
    log_p = jax.nn.log_softmax(inputs.astype(jnp.float32), axis=-1)
    q = jax.nn.softmax(targets.astype(jnp.float32), axis=-1)
    log_q = jax.nn.log_softmax(targets.astype(jnp.float32), axis=-1)
    return jnp.sum(q * (log_q - log_p)) / inputs.shape[0]


if __name__ == "__main__":
    key = jax.random.PRNGKey(0)
    k1, k2 = jax.random.split(key)
    B, N = 8, 128
    inputs = jax.random.normal(k1, (B, N), dtype=jnp.float32)
    targets = jax.random.normal(k2, (B, N), dtype=jnp.float32)

    loss = kl_loss(inputs, targets)
    jax.block_until_ready(loss)

    ref = _kl_loss_ref(inputs, targets)
    assert jnp.allclose(loss, ref, rtol=1e-5, atol=1e-5), (loss, ref)

    print("KERNEL_OK")
</pallas_src>

<mosaic_0001>
module attributes {stable_mosaic.version = 11 : i64} {
  func.func @_kl_loss_kernel(%arg0: i32, %arg1: memref<8x128xf32, #tpu.memory_space<vmem>>, %arg2: memref<8x128xf32, #tpu.memory_space<vmem>>, %arg3: memref<8x1xf32, #tpu.memory_space<vmem>>) attributes {dimension_semantics = [#tpu.dimension_semantics<parallel>], iteration_bounds = array<i64: 1>, scalar_prefetch = 0 : i64, scratch_operands = 0 : i64, tpu.core_type = #tpu.core_type<tc>, window_params = [{transform_indices = @transform_0, window_bounds = array<i64: 8, 128>}, {transform_indices = @transform_1, window_bounds = array<i64: 8, 128>}, {transform_indices = @transform_2, window_bounds = array<i64: 8, 1>}]} {
    %c0 = arith.constant 0 : index
    %c0_0 = arith.constant 0 : index
    %0 = vector.load %arg1[%c0, %c0_0] : memref<8x128xf32, #tpu.memory_space<vmem>>, vector<8x128xf32>
    %c0_1 = arith.constant 0 : index
    %c0_2 = arith.constant 0 : index
    %1 = vector.load %arg2[%c0_1, %c0_2] : memref<8x128xf32, #tpu.memory_space<vmem>>, vector<8x128xf32>
    %cst = arith.constant dense<0xFF800000> : vector<8xf32>
    %2 = vector.multi_reduction <maximumf>, %0, %cst [1] : vector<8x128xf32> to vector<8xf32>
    %3 = vector.shape_cast %2 : vector<8xf32> to vector<8x1xf32>
    %4 = vector.broadcast %3 : vector<8x1xf32> to vector<8x128xf32>
    %5 = arith.subf %0, %4 : vector<8x128xf32>
    %6 = math.exp %5 : vector<8x128xf32>
    %cst_3 = arith.constant dense<0.000000e+00> : vector<8xf32>
    %7 = vector.multi_reduction <add>, %6, %cst_3 [1] : vector<8x128xf32> to vector<8xf32>
    %8 = vector.shape_cast %7 : vector<8xf32> to vector<8x1xf32>
    %9 = math.log %8 : vector<8x1xf32>
    %cst_4 = arith.constant dense<0xFF800000> : vector<8xf32>
    %10 = vector.multi_reduction <maximumf>, %1, %cst_4 [1] : vector<8x128xf32> to vector<8xf32>
    %11 = vector.shape_cast %10 : vector<8xf32> to vector<8x1xf32>
    %12 = vector.broadcast %11 : vector<8x1xf32> to vector<8x128xf32>
    %13 = arith.subf %1, %12 : vector<8x128xf32>
    %14 = math.exp %13 : vector<8x128xf32>
    %cst_5 = arith.constant dense<0.000000e+00> : vector<8xf32>
    %15 = vector.multi_reduction <add>, %14, %cst_5 [1] : vector<8x128xf32> to vector<8xf32>
    %16 = vector.shape_cast %15 : vector<8xf32> to vector<8x1xf32>
    %17 = arith.subf %13, %5 : vector<8x128xf32>
    %18 = arith.mulf %14, %17 : vector<8x128xf32>
    %cst_6 = arith.constant dense<0.000000e+00> : vector<8xf32>
    %19 = vector.multi_reduction <add>, %18, %cst_6 [1] : vector<8x128xf32> to vector<8xf32>
    %20 = vector.shape_cast %19 : vector<8xf32> to vector<8x1xf32>
    %21 = arith.divf %20, %16 : vector<8x1xf32>
    %22 = arith.addf %21, %9 : vector<8x1xf32>
    %23 = math.log %16 : vector<8x1xf32>
    %24 = arith.subf %22, %23 : vector<8x1xf32>
    %c0_7 = arith.constant 0 : index
    %c0_8 = arith.constant 0 : index
    %25 = vector.load %arg3[%c0_7, %c0_8] : memref<8x1xf32, #tpu.memory_space<vmem>>, vector<8x1xf32>
    tpu.vector_store %arg3[%c0_7, %c0_8], %24 {strides = array<i32>} : memref<8x1xf32, #tpu.memory_space<vmem>>, vector<8x1xf32>,
    return
  }
  func.func @transform_0(%arg0: i32) -> (i32, i32) {
    %c0_i32 = arith.constant 0 : i32
    %c0_i32_0 = arith.constant 0 : i32
    return %arg0, %c0_i32 : i32, i32
  }
  func.func @transform_1(%arg0: i32) -> (i32, i32) {
    %c0_i32 = arith.constant 0 : i32
    %c0_i32_0 = arith.constant 0 : i32
    return %arg0, %c0_i32 : i32, i32
  }
  func.func @transform_2(%arg0: i32) -> (i32, i32) {
    %c0_i32 = arith.constant 0 : i32
    %c0_i32_0 = arith.constant 0 : i32
    return %arg0, %c0_i32 : i32, i32
  }
}

</mosaic_0001>

<llo_original>
// kernel: tpu_custom_call.1
$region0: #{tpu_custom_call.1}
  #allocation0 [shape = 'u32[]', space=smem, size = 0x4, offset = 0x4, fixed_abs, tag = 'smem constant byte address 0x4 - core index']
  #allocation1 [shape = 'u32[144,128]{1,0:T(1,128)}', space=vmem, size = 0x12000, scoped, tag = 'internal scratch']
  %s0 = inlined_call_operand.hbm [shape: f32[8,128], index: 0, kind: input, shape index: {}]
  %s1 = inlined_call_operand.hbm [shape: f32[8,128], index: 1, kind: input, shape index: {}]
  %s2 = inlined_call_operand.vmem [shape: f32[8,1], index: 2, kind: output, shape index: {}]
  %s3 = sld [smem:[#allocation0]]
  $region26: #{tpu_custom_call.1} parent=0
    _
  %s5 = ssub.s32 1, %s3
  %s6 = scalar_select 0, %s5, %s3
  $region1: #{tpu_custom_call.1} parent=0
    #allocation2 [shape = 'u8[4096]{0}', space=vmem, size = 0x1000, scoped, tag = 'input window, operand 0, single buffered']
    #allocation3 [shape = 's32[1]{0}', space=sflag, size = 0x4, scoped, tag = 'scoped memory for tpu_custom_call.1']
    #allocation4 [shape = 'u8[4096]{0}', space=vmem, size = 0x1000, scoped, tag = 'input window, operand 1, single buffered']
    #allocation5 [shape = 's32[1]{0}', space=sflag, size = 0x4, scoped, tag = 'scoped memory for tpu_custom_call.1']
    %7 = vsyncpa [#allocation3], 0
    %8 = vsyncpa [#allocation5], 0
    // Predicated region
    $region2: #{tpu_custom_call.1} parent=1 // pred_check
      _
    $region3: #{tpu_custom_call.1} parent=1 // pred_check_branch
      %10 = sbr.rel (0) target = $region5
    $region4: #{tpu_custom_call.1} parent=1 // pred_region
      %s12 = ssub.s32 128, 128
      %13 = vsyncadd [#allocation3], %s12
      %s15 = sshll.u32 [#allocation2], 4
      %s16 = int_to_ptr.vmem [resolvable:$true] %s15
      %18 = dma.hbm_to_vmem [thread:$0]  %s0, 128, %s16, [#allocation3]
    $region5: #{tpu_custom_call.1} parent=1 // pred_fallthru
      _
    // Predicated region
    $region6: #{tpu_custom_call.1} parent=1 // pred_check
      _
    $region7: #{tpu_custom_call.1} parent=1 // pred_check_branch
      %20 = sbr.rel (0) target = $region9
    $region8: #{tpu_custom_call.1} parent=1 // pred_region
      %s22 = ssub.s32 128, 128
      %23 = vsyncadd [#allocation5], %s22
      %s25 = sshll.u32 [#allocation4], 4
      %s26 = int_to_ptr.vmem [resolvable:$true] %s25
      %28 = dma.hbm_to_vmem [thread:$0]  %s1, 128, %s26, [#allocation5]
    $region9: #{tpu_custom_call.1} parent=1 // pred_fallthru
      _
    // Predicated region
    $region10: #{tpu_custom_call.1} parent=1 // pred_check
      _
    $region11: #{tpu_custom_call.1} parent=1 // pred_check_branch
      %30 = sbr.rel (0) target = $region13
    $region12: #{tpu_custom_call.1} parent=1 // pred_region
      %31 = dma.done [#allocation3], 128
    $region13: #{tpu_custom_call.1} parent=1 // pred_fallthru
      _
    // Predicated region
    $region14: #{tpu_custom_call.1} parent=1 // pred_check
      _
    $region15: #{tpu_custom_call.1} parent=1 // pred_check_branch
      %33 = sbr.rel (0) target = $region17
    $region16: #{tpu_custom_call.1} parent=1 // pred_region
      %34 = dma.done [#allocation5], 128
    $region17: #{tpu_custom_call.1} parent=1 // pred_fallthru
      _
    %v35 = vld [vmem:[#allocation2] sm:$0xff]
    %v36 = vld [vmem:[#allocation4] sm:$0xff]
    %37 = vmax.xlane.f32.xlu0 %v35
    %v38 = vpop.xlane.xlu0 %37
    %v39 = vsub.f32 %v35, %v38
    %v40 = vmul.f32 %v39, 1.442695
    %v41 = vpow.pop %v40
    %42 = vadd.xlane.f32.xlu0 %v41
    %v43 = vpop.xlane.xlu0 %42
    %v44 = vlog2.pop %v43
    %v45 = vmul.f32 %v44, 0.6931472
    %46 = vmax.xlane.f32.xlu0 %v36
    %v47 = vpop.xlane.xlu0 %46
    %v48 = vsub.f32 %v36, %v47
    %v49 = vmul.f32 %v48, 1.442695
    %v50 = vpow.pop %v49
    %51 = vadd.xlane.f32.xlu0 %v50
    %v52 = vpop.xlane.xlu0 %51
    %v53 = vsub.f32 %v48, %v39
    %v54 = vmul.f32 %v50, %v53
    %55 = vadd.xlane.f32.xlu0 %v54
    %v56 = vpop.xlane.xlu0 %55
    %v57 = vrcp.pop %v52
    %v58 = vmul.f32 %v56, %v57
    %v59 = vadd.f32 %v58, %v45
    %v60 = vlog2.pop %v52
    %v61 = vmul.f32 %v60, 0.6931472
    %v62 = vsub.f32 %v59, %v61
    %vm63 = vcmask 7168
    %64 = vst.msk [vmem:[%s2] sm:$0xff] %vm63, %v62
    // Predicated region
    $region18: #{tpu_custom_call.1} parent=1 // pred_check
      _
    $region19: #{tpu_custom_call.1} parent=1 // pred_check_branch
      %66 = sbr.rel (0) target = $region21
    $region20: #{tpu_custom_call.1} parent=1 // pred_region
      _
    $region21: #{tpu_custom_call.1} parent=1 // pred_fallthru
      _
    // Predicated region
    $region22: #{tpu_custom_call.1} parent=1 // pred_check
      _
    $region23: #{tpu_custom_call.1} parent=1 // pred_check_branch
      %68 = sbr.rel (0) target = $region25
    $region24: #{tpu_custom_call.1} parent=1 // pred_region
      _
    $region25: #{tpu_custom_call.1} parent=1 // pred_fallthru
      _
    %69 = vsyncpa [#allocation3], 1
    %70 = vsyncpa [#allocation5], 1

</llo_original>
